<compile_context>
chip_gen: v7x
topology: tpu7x:2x2x1
jax: 0.10.0
libtpu: 0.0.40
codegen_flags: <defaults>
</compile_context>

<pallas_src>
import jax
import jax.numpy as jnp
import numpy as np
from jax import lax
from jax.experimental import pallas as pl
from jax.experimental.pallas import tpu as pltpu


def _round_up(x, m):
    return (x + m - 1) // m * m


def _vmem_capacity_bytes():
    try:
        return int(pltpu.get_tpu_info().vmem_capacity_bytes)
    except Exception:
        return 64 * 1024 * 1024  # conservative (v7x per-core VMEM)


def _w_math_dtype():
    # bf16 VPU exists on v6e / v7x; keep the interp-weight elementwise math in f32
    # on older generations (v5e and earlier have no bf16 VALU).
    try:
        kind = jax.devices()[0].device_kind.lower()
    except Exception:
        kind = ""
    if any(t in kind for t in ("v2", "v3", "v4", "v5")):
        return jnp.float32
    return jnp.bfloat16


# ----------------------------- Pallas kernel ------------------------------- #

def make_deform_conv1d_kernel(TL, Lwin, Lin_pad, K, stride, pad, dil,
                              DGpg, Cdg_pad, Coutg_pad, w_dtype, unroll):
    JK = DGpg * K
    full_window = (Lwin == Lin_pad)

    def kernel(ws_ref, x_ref, off_ref, msk_ref, w_ref, b_ref, out_ref, col_ref):
        # ws_ref:  (nLt,) int32 SMEM    windowed x start (multiple of 128) per L-tile
        # x_ref:   (DGpg, Cdg_pad, Lin_pad) bf16   one (batch, group) slab (t-invariant)
        # off_ref: (JK, TL) f32         length-axis offsets for this L-tile
        # msk_ref: (JK, TL) bf16        modulation scalars
        # w_ref:   (Coutg_pad, R) bf16  fused conv weight for this group
        # b_ref:   (Coutg_pad, 1) f32
        # out_ref: (Coutg_pad, TL)      lane-dense output tile
        # col_ref: (R, TL) bf16 scratch fused sampled columns (im2col)
        t = pl.program_id(2)
        if full_window:
            start = 0
        else:
            start = pl.multiple_of(ws_ref[t], 128)

        # Output positions of this tile / window-row positions (int iota -> f32, exact).
        l_idx = lax.broadcasted_iota(jnp.int32, (1, TL), 1) + t * TL
        base0 = (l_idx * stride - pad).astype(jnp.float32)                    # (1, TL)
        p = (lax.broadcasted_iota(jnp.int32, (Lwin, 1), 0) + start).astype(jnp.float32)

        def tap(jk):
            j = jk // K
            k = jk % K
            if full_window:
                x_j = x_ref[j]                                                # (Cdg_pad, Lin_pad)
            else:
                x_j = x_ref[j, :, pl.ds(start, Lwin)]                         # (Cdg_pad, Lwin)
            off = off_ref[pl.ds(jk, 1), :]                                    # (1, TL) f32
            msk = msk_ref[pl.ds(jk, 1), :]                                    # (1, TL) bf16
            pos = base0 + k * dil + off                                       # (1, TL) f32
            d = p - pos                                                       # (Lwin, TL) f32 delta
            if w_dtype == jnp.bfloat16:
                # bf16 elementwise after the f32 delta (v6e/v7x: 2x VPU rate,
                # halves the live W temporary); MXU operand was bf16 anyway.
                Wk = jnp.maximum(0.0, 1.0 - jnp.abs(d.astype(jnp.bfloat16)))
            else:
                Wk = jnp.maximum(0.0, 1.0 - jnp.abs(d)).astype(jnp.bfloat16)
            s = jnp.dot(x_j, Wk, preferred_element_type=jnp.float32)          # (Cdg_pad, TL)
            s = s * msk                                                       # modulation
            if isinstance(jk, int):
                r0 = jk * Cdg_pad
            else:
                r0 = pl.multiple_of(jk * Cdg_pad, Cdg_pad)
            col_ref[pl.ds(r0, Cdg_pad), :] = s.astype(jnp.bfloat16)

        if unroll:
            # Small trip count; windowed W temporaries are small so unrolling is
            # cheap and keeps the LLO scheduler's view flat.
            for jk in range(JK):
                tap(jk)
        else:
            # Bound live ranges when DGpg*K is large.
            def body(jk, carry):
                tap(jk)
                return carry
            lax.fori_loop(0, JK, body, 0)

        # Stage 2: ONE fused contraction over (dg, tap, channel).
        acc = jnp.dot(w_ref[...], col_ref[...], preferred_element_type=jnp.float32)
        out_ref[...] = (acc + b_ref[...]).astype(out_ref.dtype)

    return kernel


def deform_conv1d(x, weight, bias, offsets, masks, *, kernel_size, stride,
                  padding, dilation, groups, deformable_groups_per_groups,
                  max_abs_offset=None):
    """x: (B, Cin, Lin); weight: (Cout, Cin//G, K); offsets/masks: (B, DG, K, Lout)."""
    B, Cin, Lin = x.shape
    Cout = weight.shape[0]
    K = kernel_size
    G = groups
    DGpg = deformable_groups_per_groups
    DG = G * DGpg
    Cdg = Cin // DG
    Coutg = Cout // G
    JK = DGpg * K
    Lout = (Lin + 2 * padding - dilation * (K - 1) - 1) // stride + 1
    assert Cin % DG == 0 and Cout % G == 0
    assert offsets.shape == (B, DG, K, Lout)
    assert masks.shape == (B, DG, K, Lout)

    # bf16 MXU operands pack 2 rows per sublane -> 16-row channel blocks; pad the
    # per-group output channels to a full sublane so output stores are unmasked.
    Cdg_pad = _round_up(Cdg, 16)
    Coutg_pad = _round_up(Coutg, 8)
    Lin_pad = _round_up(Lin, 128)
    R = JK * Cdg_pad
    out_isz = np.dtype(x.dtype).itemsize

    # Static bound on |offset| -> static sampling-window width.
    # TODO(synk): under jit, pass max_abs_offset explicitly (offsets are traced here).
    if max_abs_offset is None:
        max_abs_offset = float(jnp.max(jnp.abs(offsets)))
    moff = int(np.ceil(max_abs_offset)) + 1

    def _lwin(tl):
        w = (tl - 1) * stride + (K - 1) * dilation + 2 * moff + 2
        return min(_round_up(w + 127, 128), Lin_pad)

    def _est_vmem(tl, lwin):
        xb = DGpg * Cdg_pad * Lin_pad * 2
        offb = JK * tl * 4
        mskb = JK * tl * 2
        wb = Coutg_pad * R * 2
        bb = Coutg_pad * 128 * 4
        outb = Coutg_pad * tl * out_isz
        colb = R * tl * 2
        wtmp = lwin * tl * 6 + Cdg_pad * tl * 8  # f32 delta + bf16 W + f32 sampled temps
        return 2 * (xb + offb + mskb + wb + bb + outb) + colb + wtmp

    # Generation-aware tile / VMEM budget (v5e/v6e: 128 MiB physical, v7x: 64 MiB).
    vmem_cap = _vmem_capacity_bytes()
    budget = int(vmem_cap * 0.45)
    lout128 = _round_up(Lout, 128)
    TL, Lwin = 128, _lwin(128)
    for cand in (512, 256, 128):
        if cand > lout128:
            continue
        lw = _lwin(cand)
        if cand == 128 or _est_vmem(cand, lw) <= budget:
            TL, Lwin = cand, lw
            break
    nLt = _round_up(Lout, TL) // TL
    Lout_pad = nLt * TL
    vmem_limit = int(min(vmem_cap * 0.9,
                         max(32 * 1024 * 1024, 2 * _est_vmem(TL, Lwin))))

    # Per-tile window starts (static; 128-lane aligned so the in-kernel x slice is
    # tile-aligned).  Window covers every reachable sampling position for the tile
    # given |offset| <= moff; positions outside [0, Lin) contribute zero anyway.
    if Lwin >= Lin_pad:
        Lwin = Lin_pad
        win_starts = np.zeros((nLt,), np.int32)
    else:
        ws = []
        for t in range(nLt):
            lo = t * TL * stride - padding - moff
            s = (lo // 128) * 128
            ws.append(max(0, min(s, Lin_pad - Lwin)))
        win_starts = np.asarray(ws, np.int32)

    # --- wrapper-side reshapes / padding: all in-kernel slicing is aligned ---
    x_r = x.reshape(B, G, DGpg, Cdg, Lin)
    x_p = jnp.pad(x_r, ((0, 0), (0, 0), (0, 0),
                        (0, Cdg_pad - Cdg), (0, Lin_pad - Lin))).astype(jnp.bfloat16)

    pad_l = Lout_pad - Lout
    off_p = jnp.pad(offsets, ((0, 0), (0, 0), (0, 0), (0, pad_l))) \
        .reshape(B, G, JK, Lout_pad).astype(jnp.float32)
    msk_p = jnp.pad(masks, ((0, 0), (0, 0), (0, 0), (0, pad_l))) \
        .reshape(B, G, JK, Lout_pad).astype(jnp.bfloat16)

    # weight (Cout, Cin//G, K) -> fused (G, Coutg_pad, DGpg*K*Cdg_pad) matching the
    # (j, k, c) row order of the column scratch; padded rows/channels get zeros.
    w_r = weight.reshape(G, Coutg, DGpg, Cdg, K)
    w_r = jnp.pad(w_r, ((0, 0), (0, Coutg_pad - Coutg), (0, 0),
                        (0, Cdg_pad - Cdg), (0, 0)))
    w_f = jnp.transpose(w_r, (0, 1, 2, 4, 3)).reshape(G, Coutg_pad, R).astype(jnp.bfloat16)

    b_r = jnp.pad(bias.reshape(G, Coutg), ((0, 0), (0, Coutg_pad - Coutg)))
    b_r = b_r.reshape(G, Coutg_pad, 1).astype(jnp.float32)

    w_dtype = _w_math_dtype()
    unroll = JK <= 8
    kernel = make_deform_conv1d_kernel(TL, Lwin, Lin_pad, K, stride, padding, dilation,
                                       DGpg, Cdg_pad, Coutg_pad, w_dtype, unroll)

    flops = B * G * nLt * (2 * JK * Cdg_pad * Lwin * TL     # stage 1 (windowed interp matmuls)
                           + 2 * Coutg_pad * R * TL)         # stage 2 (fused conv)
    bytes_accessed = (x_p.size * 2 + off_p.size * 4 + msk_p.size * 2
                      + w_f.size * 2 + b_r.size * 4
                      + B * G * Coutg_pad * Lout_pad * out_isz)

    out = pl.pallas_call(
        kernel,
        out_shape=jax.ShapeDtypeStruct((B, G, Coutg_pad, Lout_pad), x.dtype),
        grid_spec=pltpu.PrefetchScalarGridSpec(
            num_scalar_prefetch=1,
            grid=(B, G, nLt),
            in_specs=[
                pl.BlockSpec((None, None, DGpg, Cdg_pad, Lin_pad),
                             lambda b, g, t, ws: (b, g, 0, 0, 0)),
                pl.BlockSpec((None, None, JK, TL),
                             lambda b, g, t, ws: (b, g, 0, t)),
                pl.BlockSpec((None, None, JK, TL),
                             lambda b, g, t, ws: (b, g, 0, t)),
                pl.BlockSpec((None, Coutg_pad, R), lambda b, g, t, ws: (g, 0, 0)),
                pl.BlockSpec((None, Coutg_pad, 1), lambda b, g, t, ws: (g, 0, 0)),
            ],
            out_specs=pl.BlockSpec((None, None, Coutg_pad, TL),
                                   lambda b, g, t, ws: (b, g, 0, t)),
            scratch_shapes=[pltpu.VMEM((R, TL), jnp.bfloat16)],
        ),
        compiler_params=pltpu.CompilerParams(
            # t is "arbitrary" so megacore (v7x) shards over B/G, preserving the
            # t-invariant x-slab DMA revisit on each core.
            dimension_semantics=("parallel", "parallel", "arbitrary"),
            vmem_limit_bytes=vmem_limit),
        cost_estimate=pl.CostEstimate(flops=int(flops), transcendentals=0,
                                      bytes_accessed=int(bytes_accessed)),
    )(jnp.asarray(win_starts), x_p, off_p, msk_p, w_f, b_r)

    return out[:, :, :Coutg, :Lout].reshape(B, Cout, Lout)


# --------------------------- plain-JAX glue ops ----------------------------- #

def depthwise_conv1d(x, w, b, pad):
    # x: (B, C, L), w: (C, 1, k), b: (C,)
    out = lax.conv_general_dilated(
        x, w, window_strides=(1,), padding=[(pad, pad)],
        dimension_numbers=('NCH', 'OIH', 'NCH'),
        feature_group_count=x.shape[1])
    return out + b[None, :, None]


def group_norm_per_channel(x, gamma, beta, eps=1e-5):
    # GroupNorm with num_groups == num_channels -> per-channel norm over L
    mean = jnp.mean(x, axis=-1, keepdims=True)
    var = jnp.var(x, axis=-1, keepdims=True)
    xn = (x - mean) * jax.lax.rsqrt(var + eps)
    return xn * gamma[None, :, None] + beta[None, :, None]


def pointwise_conv(x, w, b):
    # 1x1 channel-mixing conv (the module's nn.Conv3d(kernel_size=1) pointwise stage)
    return jnp.einsum('oc,bcl->bol', w, x) + b[None, :, None]


def get_modulation_scalar(x, modulation_type='none', groups=None):
    t = modulation_type.lower()
    if t == 'none':
        return x
    elif t == 'softmax':
        b, c = x.shape[:2]
        spatial = x.shape[2:]
        return jax.nn.softmax(
            x.reshape(b, groups, -1, *spatial), axis=2).reshape(b, c, *spatial)
    elif t == 'sigmoid':
        return jax.nn.sigmoid(x)
    elif t == 'tanh':
        return jnp.tanh(x)
    else:
        raise NotImplementedError(f'{modulation_type} is not implemented.')


# ------------------------------ reference ---------------------------------- #

def deform_conv1d_ref(x, weight, bias, offsets, masks, K, stride, pad, dil, G, DGpg):
    B, Cin, Lin = x.shape
    Cout = weight.shape[0]
    DG = G * DGpg
    Lout = offsets.shape[-1]
    Cdg = Cin // DG
    Cg = Cin // G
    Coutg = Cout // G
    l = jnp.arange(Lout, dtype=jnp.float32)
    k = jnp.arange(K, dtype=jnp.float32)
    base = l[None, :] * stride - pad + k[:, None] * dil               # (K, Lout)
    pos = base[None, None] + offsets                                  # (B, DG, K, Lout)
    p = jnp.arange(Lin, dtype=jnp.float32)
    W = jnp.maximum(0.0, 1.0 - jnp.abs(
        p[None, None, None, :, None] - pos[:, :, :, None, :]))        # (B,DG,K,Lin,Lout)
    xg = x.reshape(B, DG, Cdg, Lin)
    sampled = jnp.einsum('bdcp,bdkpl->bdckl', xg, W,
                         precision=jax.lax.Precision.HIGHEST)         # (B,DG,Cdg,K,Lout)
    sampled = sampled * masks[:, :, None, :, :]
    sampled = sampled.reshape(B, Cin, K, Lout)
    out = jnp.zeros((B, Cout, Lout), jnp.float32)
    for g in range(G):
        col = sampled[:, g * Cg:(g + 1) * Cg]
        wg = weight[g * Coutg:(g + 1) * Coutg]
        og = jnp.einsum('ock,bckl->bol', wg, col,
                        precision=jax.lax.Precision.HIGHEST)
        out = out.at[:, g * Coutg:(g + 1) * Coutg].set(og)
    return out + bias[None, :, None]


# --------------------------------- main ------------------------------------ #

if __name__ == "__main__":
    key = jax.random.PRNGKey(0)
    keys = jax.random.split(key, 14)

    # ---- Test 1: full DeformConv1d forward at small shapes (full-window path) ----
    B, Cin, Cout, L = 2, 8, 8, 16
    K, stride, pad, dil = 3, 1, 1, 1
    G, DGpg = 2, 1
    DG = G * DGpg
    dw_k = 7
    offset_scale = 1.0
    modulation_type = 'none'

    x = jax.random.normal(keys[0], (B, Cin, L), jnp.float32)

    # module parameters (shapes per DeformConv1d.__init__); values deterministic.
    # NOTE: the module zero-inits the offset/attn nets (=> zero offsets, unit mask);
    # we use small random values instead so the deformable sampling path is exercised.
    weight = 0.02 * jax.random.normal(keys[1], (Cout, Cin // G, K), jnp.float32)
    bias = 0.02 * jax.random.normal(keys[2], (Cout,), jnp.float32)

    off_dw_w = 0.1 * jax.random.normal(keys[3], (Cin, 1, dw_k), jnp.float32)
    off_dw_b = jnp.zeros((Cin,), jnp.float32)
    off_gn_g = jnp.ones((Cin,), jnp.float32)
    off_gn_b = jnp.zeros((Cin,), jnp.float32)
    off_pw_w = 0.1 * jax.random.normal(keys[4], (DG * K * 3, Cin), jnp.float32)
    off_pw_b = 0.1 * jax.random.normal(keys[5], (DG * K * 3,), jnp.float32)

    msk_dw_w = 0.1 * jax.random.normal(keys[6], (Cin, 1, dw_k), jnp.float32)
    msk_dw_b = jnp.zeros((Cin,), jnp.float32)
    msk_gn_g = jnp.ones((Cin,), jnp.float32)
    msk_gn_b = jnp.zeros((Cin,), jnp.float32)
    msk_pw_w = 0.1 * jax.random.normal(keys[7], (DG * K, Cin), jnp.float32)
    msk_pw_b = jnp.ones((DG * K,), jnp.float32)

    # offset_field branch
    h = depthwise_conv1d(x, off_dw_w, off_dw_b, (dw_k - 1) // 2)
    h = group_norm_per_channel(h, off_gn_g, off_gn_b)
    offset_field = pointwise_conv(h, off_pw_w, off_pw_b) * offset_scale  # (B, DG*K*3, L)

    # attn_mask branch
    h2 = depthwise_conv1d(x, msk_dw_w, msk_dw_b, (dw_k - 1) // 2)
    h2 = group_norm_per_channel(h2, msk_gn_g, msk_gn_b)
    attn_mask = pointwise_conv(h2, msk_pw_w, msk_pw_b)                   # (B, DG*K, L)
    attn_mask = get_modulation_scalar(attn_mask, modulation_type, DG)

    Lout = (L + 2 * pad - dil * (K - 1) - 1) // stride + 1
    assert Lout == L

    # TODO(synk): torch.ops.custom_op.deform_conv1d's offset channel layout (3 offset
    # components per kernel tap for a 1-D op) is opaque; we use the last component as
    # the length-axis offset and ignore the other two.
    offsets = offset_field.reshape(B, DG, K, 3, L)[:, :, :, 2, :]        # (B, DG, K, Lout)
    masks = attn_mask.reshape(B, DG, K, L)                               # (B, DG, K, Lout)

    out = deform_conv1d(
        x, weight, bias, offsets, masks,
        kernel_size=K, stride=stride, padding=pad, dilation=dil,
        groups=G, deformable_groups_per_groups=DGpg)
    out = jax.block_until_ready(out)

    ref = deform_conv1d_ref(x, weight, bias, offsets, masks,
                            K, stride, pad, dil, G, DGpg)
    np.testing.assert_allclose(np.asarray(out), np.asarray(ref),
                               atol=1e-2, rtol=1e-2)

    # ---- Test 2: longer sequence exercising the windowed-sampling + tiled-Lout path ----
    B2, Cin2, Cout2, L2 = 1, 8, 8, 1024
    K2, stride2, pad2, dil2 = 5, 1, 2, 1
    G2, DGpg2 = 2, 1
    DG2 = G2 * DGpg2
    Lout2 = (L2 + 2 * pad2 - dil2 * (K2 - 1) - 1) // stride2 + 1

    x2 = jax.random.normal(keys[8], (B2, Cin2, L2), jnp.float32)
    w2 = 0.02 * jax.random.normal(keys[9], (Cout2, Cin2 // G2, K2), jnp.float32)
    b2 = 0.02 * jax.random.normal(keys[10], (Cout2,), jnp.float32)
    off2 = jax.random.uniform(keys[11], (B2, DG2, K2, Lout2), jnp.float32,
                              minval=-4.0, maxval=4.0)
    msk2 = jax.random.uniform(keys[12], (B2, DG2, K2, Lout2), jnp.float32)

    out2 = deform_conv1d(
        x2, w2, b2, off2, msk2,
        kernel_size=K2, stride=stride2, padding=pad2, dilation=dil2,
        groups=G2, deformable_groups_per_groups=DGpg2)
    out2 = jax.block_until_ready(out2)

    ref2 = deform_conv1d_ref(x2, w2, b2, off2, msk2,
                             K2, stride2, pad2, dil2, G2, DGpg2)
    np.testing.assert_allclose(np.asarray(out2), np.asarray(ref2),
                               atol=1e-2, rtol=1e-2)

    print("KERNEL_OK")
</pallas_src>

<mosaic_0001>
module attributes {stable_mosaic.version = 11 : i64} {
  func.func @kernel(%arg0: i32, %arg1: i32, %arg2: i32, %arg3: memref<1xi32, #tpu.memory_space<smem>>, %arg4: memref<1x1x1x16x128xbf16, #tpu.memory_space<vmem>>, %arg5: memref<1x1x3x128xf32, #tpu.memory_space<vmem>>, %arg6: memref<1x1x3x128xbf16, #tpu.memory_space<vmem>>, %arg7: memref<1x8x48xbf16, #tpu.memory_space<vmem>>, %arg8: memref<1x8x1xf32, #tpu.memory_space<vmem>>, %arg9: memref<1x1x8x128xf32, #tpu.memory_space<vmem>>, %arg10: memref<48x128xbf16, #tpu.memory_space<vmem>>) attributes {dimension_semantics = [#tpu.dimension_semantics<parallel>, #tpu.dimension_semantics<parallel>, #tpu.dimension_semantics<arbitrary>], iteration_bounds = array<i64: 2, 2, 1>, scalar_prefetch = 1 : i64, scratch_operands = 1 : i64, tpu.core_type = #tpu.core_type<tc>, window_params = [{transform_indices = @transform_0, window_bounds = array<i64: 1, 1, 1, 16, 128>}, {transform_indices = @transform_1, window_bounds = array<i64: 1, 1, 3, 128>}, {transform_indices = @transform_2, window_bounds = array<i64: 1, 1, 3, 128>}, {transform_indices = @transform_3, window_bounds = array<i64: 1, 8, 48>}, {transform_indices = @transform_4, window_bounds = array<i64: 1, 8, 1>}, {transform_indices = @transform_5, window_bounds = array<i64: 1, 1, 8, 128>}]} {
    %0 = tpu.iota {dimensions = array<i32: 1>} : vector<1x128xi32>
    %c128_i32 = arith.constant 128 : i32
    %1 = arith.muli %arg2, %c128_i32 : i32
    %2 = vector.broadcast %1 : i32 to vector<1x128xi32>
    %3 = arith.addi %0, %2 : vector<1x128xi32>
    %c1_i32 = arith.constant 1 : i32
    %4 = vector.broadcast %c1_i32 : i32 to vector<1x128xi32>
    %5 = arith.muli %3, %4 : vector<1x128xi32>
    %c1_i32_0 = arith.constant 1 : i32
    %6 = vector.broadcast %c1_i32_0 : i32 to vector<1x128xi32>
    %7 = arith.subi %5, %6 : vector<1x128xi32>
    %8 = arith.sitofp %7 : vector<1x128xi32> to vector<1x128xf32>
    %9 = tpu.iota {dimensions = array<i32: 0>} : vector<128x1xi32>
    %c0_i32 = arith.constant 0 : i32
    %10 = vector.broadcast %c0_i32 : i32 to vector<128x1xi32>
    %11 = arith.addi %9, %10 : vector<128x1xi32>
    %12 = arith.sitofp %11 : vector<128x1xi32> to vector<128x1xf32>
    %c0 = arith.constant 0 : index
    %c0_1 = arith.constant 0 : index
    %c0_2 = arith.constant 0 : index
    %c0_3 = arith.constant 0 : index
    %c0_4 = arith.constant 0 : index
    %13 = vector.load %arg4[%c0, %c0_1, %c0_2, %c0_3, %c0_4] : memref<1x1x1x16x128xbf16, #tpu.memory_space<vmem>>, vector<1x1x1x16x128xbf16>
    %14 = vector.shape_cast %13 : vector<1x1x1x16x128xbf16> to vector<16x128xbf16>
    %c0_5 = arith.constant 0 : index
    %c0_6 = arith.constant 0 : index
    %c0_7 = arith.constant 0 : index
    %c0_8 = arith.constant 0 : index
    %15 = vector.load %arg5[%c0_5, %c0_6, %c0_7, %c0_8] : memref<1x1x3x128xf32, #tpu.memory_space<vmem>>, vector<1x1x1x128xf32>
    %16 = vector.shape_cast %15 : vector<1x1x1x128xf32> to vector<1x128xf32>
    %c0_9 = arith.constant 0 : index
    %c0_10 = arith.constant 0 : index
    %c0_11 = arith.constant 0 : index
    %c0_12 = arith.constant 0 : index
    %17 = vector.load %arg6[%c0_9, %c0_10, %c0_11, %c0_12] : memref<1x1x3x128xbf16, #tpu.memory_space<vmem>>, vector<1x1x1x128xbf16>
    %18 = vector.shape_cast %17 : vector<1x1x1x128xbf16> to vector<1x128xbf16>
    %cst = arith.constant 0.000000e+00 : f32
    %19 = vector.broadcast %cst : f32 to vector<1x128xf32>
    %20 = arith.addf %8, %19 : vector<1x128xf32>
    %21 = arith.addf %20, %16 : vector<1x128xf32>
    %22 = vector.broadcast %12 : vector<128x1xf32> to vector<128x128xf32>
    %23 = vector.broadcast %21 : vector<1x128xf32> to vector<128x128xf32>
    %24 = arith.subf %22, %23 : vector<128x128xf32>
    %25 = arith.truncf %24 : vector<128x128xf32> to vector<128x128xbf16>
    %26 = math.absf %25 : vector<128x128xbf16>
    %cst_13 = arith.constant 1.000000e+00 : bf16
    %27 = vector.broadcast %cst_13 : bf16 to vector<128x128xbf16>
    %28 = arith.subf %27, %26 : vector<128x128xbf16>
    %cst_14 = arith.constant 0.000000e+00 : bf16
    %29 = vector.broadcast %cst_14 : bf16 to vector<128x128xbf16>
    %30 = arith.maximumf %29, %28 : vector<128x128xbf16>
    %cst_15 = arith.constant dense<0.000000e+00> : vector<16x128xf32>
    %31 = tpu.matmul %14, %30, %cst_15 {dimension_numbers = #tpu.dot_dimension_numbers<[1], [0], [0], [1], [0, 0, 1, 1], [], []>} : vector<16x128xbf16>, vector<128x128xbf16>, vector<16x128xf32> -> vector<16x128xf32>
    %32 = arith.extf %18 : vector<1x128xbf16> to vector<1x128xf32>
    %33 = vector.broadcast %32 : vector<1x128xf32> to vector<16x128xf32>
    %34 = arith.mulf %31, %33 : vector<16x128xf32>
    %35 = arith.truncf %34 : vector<16x128xf32> to vector<16x128xbf16>
    %c0_16 = arith.constant 0 : index
    %c0_17 = arith.constant 0 : index
    %36 = vector.load %arg10[%c0_16, %c0_17] : memref<48x128xbf16, #tpu.memory_space<vmem>>, vector<16x128xbf16>
    tpu.vector_store %arg10[%c0_16, %c0_17], %35 {strides = array<i32>} : memref<48x128xbf16, #tpu.memory_space<vmem>>, vector<16x128xbf16>,
    %c0_18 = arith.constant 0 : index
    %c0_19 = arith.constant 0 : index
    %c0_20 = arith.constant 0 : index
    %c0_21 = arith.constant 0 : index
    %c0_22 = arith.constant 0 : index
    %37 = vector.load %arg4[%c0_18, %c0_19, %c0_20, %c0_21, %c0_22] : memref<1x1x1x16x128xbf16, #tpu.memory_space<vmem>>, vector<1x1x1x16x128xbf16>
    %38 = vector.shape_cast %37 : vector<1x1x1x16x128xbf16> to vector<16x128xbf16>
    %c0_23 = arith.constant 0 : index
    %c0_24 = arith.constant 0 : index
    %c1 = arith.constant 1 : index
    %c0_25 = arith.constant 0 : index
    %39 = vector.load %arg5[%c0_23, %c0_24, %c1, %c0_25] : memref<1x1x3x128xf32, #tpu.memory_space<vmem>>, vector<1x1x1x128xf32>
    %40 = vector.shape_cast %39 : vector<1x1x1x128xf32> to vector<1x128xf32>
    %c0_26 = arith.constant 0 : index
    %c0_27 = arith.constant 0 : index
    %c1_28 = arith.constant 1 : index
    %c0_29 = arith.constant 0 : index
    %41 = vector.load %arg6[%c0_26, %c0_27, %c1_28, %c0_29] : memref<1x1x3x128xbf16, #tpu.memory_space<vmem>>, vector<1x1x1x128xbf16>
    %42 = vector.shape_cast %41 : vector<1x1x1x128xbf16> to vector<1x128xbf16>
    %cst_30 = arith.constant 1.000000e+00 : f32
    %43 = vector.broadcast %cst_30 : f32 to vector<1x128xf32>
    %44 = arith.addf %8, %43 : vector<1x128xf32>
    %45 = arith.addf %44, %40 : vector<1x128xf32>
    %46 = vector.broadcast %12 : vector<128x1xf32> to vector<128x128xf32>
    %47 = vector.broadcast %45 : vector<1x128xf32> to vector<128x128xf32>
    %48 = arith.subf %46, %47 : vector<128x128xf32>
    %49 = arith.truncf %48 : vector<128x128xf32> to vector<128x128xbf16>
    %50 = math.absf %49 : vector<128x128xbf16>
    %cst_31 = arith.constant 1.000000e+00 : bf16
    %51 = vector.broadcast %cst_31 : bf16 to vector<128x128xbf16>
    %52 = arith.subf %51, %50 : vector<128x128xbf16>
    %cst_32 = arith.constant 0.000000e+00 : bf16
    %53 = vector.broadcast %cst_32 : bf16 to vector<128x128xbf16>
    %54 = arith.maximumf %53, %52 : vector<128x128xbf16>
    %cst_33 = arith.constant dense<0.000000e+00> : vector<16x128xf32>
    %55 = tpu.matmul %38, %54, %cst_33 {dimension_numbers = #tpu.dot_dimension_numbers<[1], [0], [0], [1], [0, 0, 1, 1], [], []>} : vector<16x128xbf16>, vector<128x128xbf16>, vector<16x128xf32> -> vector<16x128xf32>
    %56 = arith.extf %42 : vector<1x128xbf16> to vector<1x128xf32>
    %57 = vector.broadcast %56 : vector<1x128xf32> to vector<16x128xf32>
    %58 = arith.mulf %55, %57 : vector<16x128xf32>
    %59 = arith.truncf %58 : vector<16x128xf32> to vector<16x128xbf16>
    %c16 = arith.constant 16 : index
    %c0_34 = arith.constant 0 : index
    %60 = vector.load %arg10[%c16, %c0_34] : memref<48x128xbf16, #tpu.memory_space<vmem>>, vector<16x128xbf16>
    tpu.vector_store %arg10[%c16, %c0_34], %59 {strides = array<i32>} : memref<48x128xbf16, #tpu.memory_space<vmem>>, vector<16x128xbf16>,
    %c0_35 = arith.constant 0 : index
    %c0_36 = arith.constant 0 : index
    %c0_37 = arith.constant 0 : index
    %c0_38 = arith.constant 0 : index
    %c0_39 = arith.constant 0 : index
    %61 = vector.load %arg4[%c0_35, %c0_36, %c0_37, %c0_38, %c0_39] : memref<1x1x1x16x128xbf16, #tpu.memory_space<vmem>>, vector<1x1x1x16x128xbf16>
    %62 = vector.shape_cast %61 : vector<1x1x1x16x128xbf16> to vector<16x128xbf16>
    %c0_40 = arith.constant 0 : index
    %c0_41 = arith.constant 0 : index
    %c2 = arith.constant 2 : index
    %c0_42 = arith.constant 0 : index
    %63 = vector.load %arg5[%c0_40, %c0_41, %c2, %c0_42] : memref<1x1x3x128xf32, #tpu.memory_space<vmem>>, vector<1x1x1x128xf32>
    %64 = vector.shape_cast %63 : vector<1x1x1x128xf32> to vector<1x128xf32>
    %c0_43 = arith.constant 0 : index
    %c0_44 = arith.constant 0 : index
    %c2_45 = arith.constant 2 : index
    %c0_46 = arith.constant 0 : index
    %65 = vector.load %arg6[%c0_43, %c0_44, %c2_45, %c0_46] : memref<1x1x3x128xbf16, #tpu.memory_space<vmem>>, vector<1x1x1x128xbf16>
    %66 = vector.shape_cast %65 : vector<1x1x1x128xbf16> to vector<1x128xbf16>
    %cst_47 = arith.constant 2.000000e+00 : f32
    %67 = vector.broadcast %cst_47 : f32 to vector<1x128xf32>
    %68 = arith.addf %8, %67 : vector<1x128xf32>
    %69 = arith.addf %68, %64 : vector<1x128xf32>
    %70 = vector.broadcast %12 : vector<128x1xf32> to vector<128x128xf32>
    %71 = vector.broadcast %69 : vector<1x128xf32> to vector<128x128xf32>
    %72 = arith.subf %70, %71 : vector<128x128xf32>
    %73 = arith.truncf %72 : vector<128x128xf32> to vector<128x128xbf16>
    %74 = math.absf %73 : vector<128x128xbf16>
    %cst_48 = arith.constant 1.000000e+00 : bf16
    %75 = vector.broadcast %cst_48 : bf16 to vector<128x128xbf16>
    %76 = arith.subf %75, %74 : vector<128x128xbf16>
    %cst_49 = arith.constant 0.000000e+00 : bf16
    %77 = vector.broadcast %cst_49 : bf16 to vector<128x128xbf16>
    %78 = arith.maximumf %77, %76 : vector<128x128xbf16>
    %cst_50 = arith.constant dense<0.000000e+00> : vector<16x128xf32>
    %79 = tpu.matmul %62, %78, %cst_50 {dimension_numbers = #tpu.dot_dimension_numbers<[1], [0], [0], [1], [0, 0, 1, 1], [], []>} : vector<16x128xbf16>, vector<128x128xbf16>, vector<16x128xf32> -> vector<16x128xf32>
    %80 = arith.extf %66 : vector<1x128xbf16> to vector<1x128xf32>
    %81 = vector.broadcast %80 : vector<1x128xf32> to vector<16x128xf32>
    %82 = arith.mulf %79, %81 : vector<16x128xf32>
    %83 = arith.truncf %82 : vector<16x128xf32> to vector<16x128xbf16>
    %c32 = arith.constant 32 : index
    %c0_51 = arith.constant 0 : index
    %84 = vector.load %arg10[%c32, %c0_51] : memref<48x128xbf16, #tpu.memory_space<vmem>>, vector<16x128xbf16>
    tpu.vector_store %arg10[%c32, %c0_51], %83 {strides = array<i32>} : memref<48x128xbf16, #tpu.memory_space<vmem>>, vector<16x128xbf16>,
    %c0_52 = arith.constant 0 : index
    %c0_53 = arith.constant 0 : index
    %c0_54 = arith.constant 0 : index
    %85 = vector.load %arg7[%c0_52, %c0_53, %c0_54] : memref<1x8x48xbf16, #tpu.memory_space<vmem>>, vector<1x8x48xbf16>
    %86 = vector.shape_cast %85 : vector<1x8x48xbf16> to vector<8x48xbf16>
    %c0_55 = arith.constant 0 : index
    %c0_56 = arith.constant 0 : index
    %87 = vector.load %arg10[%c0_55, %c0_56] : memref<48x128xbf16, #tpu.memory_space<vmem>>, vector<48x128xbf16>
    %cst_57 = arith.constant dense<0.000000e+00> : vector<8x128xf32>
    %88 = tpu.matmul %86, %87, %cst_57 {dimension_numbers = #tpu.dot_dimension_numbers<[1], [0], [0], [1], [0, 0, 1, 1], [], []>} : vector<8x48xbf16>, vector<48x128xbf16>, vector<8x128xf32> -> vector<8x128xf32>
    %c0_58 = arith.constant 0 : index
    %c0_59 = arith.constant 0 : index
    %c0_60 = arith.constant 0 : index
    %89 = vector.load %arg8[%c0_58, %c0_59, %c0_60] : memref<1x8x1xf32, #tpu.memory_space<vmem>>, vector<1x8x1xf32>
    %90 = vector.shape_cast %89 : vector<1x8x1xf32> to vector<8x1xf32>
    %91 = vector.broadcast %90 : vector<8x1xf32> to vector<8x128xf32>
    %92 = arith.addf %88, %91 : vector<8x128xf32>
    %c0_61 = arith.constant 0 : index
    %c0_62 = arith.constant 0 : index
    %c0_63 = arith.constant 0 : index
    %c0_64 = arith.constant 0 : index
    %93 = vector.load %arg9[%c0_61, %c0_62, %c0_63, %c0_64] : memref<1x1x8x128xf32, #tpu.memory_space<vmem>>, vector<1x1x8x128xf32>
    %94 = vector.shape_cast %93 : vector<1x1x8x128xf32> to vector<8x128xf32>
    %95 = vector.shape_cast %92 : vector<8x128xf32> to vector<1x1x8x128xf32>
    tpu.vector_store %arg9[%c0_61, %c0_62, %c0_63, %c0_64], %95 {strides = array<i32>} : memref<1x1x8x128xf32, #tpu.memory_space<vmem>>, vector<1x1x8x128xf32>,
    return
  }
  func.func @transform_0(%arg0: i32, %arg1: i32, %arg2: i32, %arg3: memref<1xi32, #tpu.memory_space<smem>>) -> (i32, i32, i32, i32, i32) {
    %c0_i32 = arith.constant 0 : i32
    %c0_i32_0 = arith.constant 0 : i32
    %c0_i32_1 = arith.constant 0 : i32
    %c0_i32_2 = arith.constant 0 : i32
    return %arg0, %arg1, %c0_i32, %c0_i32_0, %c0_i32_1 : i32, i32, i32, i32, i32
  }
  func.func @transform_1(%arg0: i32, %arg1: i32, %arg2: i32, %arg3: memref<1xi32, #tpu.memory_space<smem>>) -> (i32, i32, i32, i32) {
    %c0_i32 = arith.constant 0 : i32
    %c0_i32_0 = arith.constant 0 : i32
    return %arg0, %arg1, %c0_i32, %arg2 : i32, i32, i32, i32
  }
  func.func @transform_2(%arg0: i32, %arg1: i32, %arg2: i32, %arg3: memref<1xi32, #tpu.memory_space<smem>>) -> (i32, i32, i32, i32) {
    %c0_i32 = arith.constant 0 : i32
    %c0_i32_0 = arith.constant 0 : i32
    return %arg0, %arg1, %c0_i32, %arg2 : i32, i32, i32, i32
  }
  func.func @transform_3(%arg0: i32, %arg1: i32, %arg2: i32, %arg3: memref<1xi32, #tpu.memory_space<smem>>) -> (i32, i32, i32) {
    %c0_i32 = arith.constant 0 : i32
    %c0_i32_0 = arith.constant 0 : i32
    %c0_i32_1 = arith.constant 0 : i32
    return %arg1, %c0_i32, %c0_i32_0 : i32, i32, i32
  }
  func.func @transform_4(%arg0: i32, %arg1: i32, %arg2: i32, %arg3: memref<1xi32, #tpu.memory_space<smem>>) -> (i32, i32, i32) {
    %c0_i32 = arith.constant 0 : i32
    %c0_i32_0 = arith.constant 0 : i32
    %c0_i32_1 = arith.constant 0 : i32
    return %arg1, %c0_i32, %c0_i32_0 : i32, i32, i32
  }
  func.func @transform_5(%arg0: i32, %arg1: i32, %arg2: i32, %arg3: memref<1xi32, #tpu.memory_space<smem>>) -> (i32, i32, i32, i32) {
    %c0_i32 = arith.constant 0 : i32
    %c0_i32_0 = arith.constant 0 : i32
    return %arg0, %arg1, %c0_i32, %arg2 : i32, i32, i32, i32
  }
}

</mosaic_0001>

<llo_original>
// kernel: tpu_custom_call.1
$region0: #{tpu_custom_call.1}
  #allocation0 [shape = 'u32[]', space=smem, size = 0x4, offset = 0x4, fixed_abs, tag = 'smem constant byte address 0x4 - core index']
  #allocation1 [shape = 'u32[144,128]{1,0:T(1,128)}', space=vmem, size = 0x12000, scoped, tag = 'internal scratch']
  #allocation2 [shape = 'bf16[48,128]{1,0:T(16,128)(2,1)}', space=vmem, size = 0x3000, scoped, tag = 'scratch operand']
  #allocation3 [shape = 's32[1]{0}', space=sflag, size = 0x4, scoped, tag = 'scoped memory for tpu_custom_call.1']
  #allocation4 [shape = 's32[1]{0:T(128)S(6)}', space=smem, size = 0x200, scoped, tag = 'prefetched SMEM operand 0']
  %s0 = inlined_call_operand.<no memory space> [shape: s32[1], index: 0, kind: input, shape index: {}]
  %s1 = inlined_call_operand.vmem [shape: bf16[2,2,1,16,128], index: 1, kind: input, shape index: {}]
  %s2 = inlined_call_operand.vmem [shape: f32[2,2,3,128], index: 2, kind: input, shape index: {}]
  %s3 = inlined_call_operand.vmem [shape: bf16[2,2,3,128], index: 3, kind: input, shape index: {}]
  %s4 = inlined_call_operand.vmem [shape: bf16[2,8,48], index: 4, kind: input, shape index: {}]
  %s5 = inlined_call_operand.vmem [shape: f32[2,8,1], index: 5, kind: input, shape index: {}]
  %s6 = inlined_call_operand.hbm [shape: f32[2,2,8,128], index: 6, kind: output, shape index: {}]
  %s7 = sld [smem:[#allocation0]]
  $region53: #{tpu_custom_call.1} parent=0
    _
  %s9 = ssub.s32 1, %s7
  %s10 = scalar_select 0, %s9, %s7
  %11 = sst [smem:[#allocation4]] %s0
  $region1: #{tpu_custom_call.1} parent=0
    #allocation5 [shape = 'u8[8192]{0}', space=vmem, size = 0x2000, scoped, tag = 'output window, operand 0']
    #allocation6 [shape = 's32[2]{0}', space=sflag, size = 0x8, scoped, tag = 'scoped memory for tpu_custom_call.1']
    %12 = vsyncpa [#allocation6], 0
    %s13 = scalar_lea.sflag [#allocation6], 1
    %14 = vsyncpa %s13, 0
    loop: start=0, step=1, limit=6
    $region2: #{tpu_custom_call.1} parent=1 // loop_pre_header
      _
    $region3: #{tpu_custom_call.1} parent=1 // loop_header
      %s16 = sphi 0, %s20
      %p17 = scmp.ge.s32.totalorder %s16, 6
      %s23 = sphi 0, %s42
      %s24 = sphi 0, %s38
      %s25 = sphi 0, %s34
      %s26 = sphi 0, %s23
      %s27 = sphi 0, %s24
      %s28 = sphi 0, %s25
      %s29 = sphi 0, %s26
      %s30 = sphi 0, %s27
      %s31 = sphi 0, %s28
      %s47 = sphi 0, %s49
      %s50 = sphi 0, %s47
      %s51 = sphi 0, %s50
      %s67 = sphi 0, %s51
      %s77 = sphi 0, %s79
      %s80 = sphi 0, %s77
      %s81 = sphi 0, %s80
      %s97 = sphi 0, %s81
      %s107 = sphi 0, %s109
      %s110 = sphi 0, %s107
      %s111 = sphi 0, %s110
      %s127 = sphi 0, %s111
      %s133 = sphi 0, %s135
      %s136 = sphi 0, %s133
      %s137 = sphi 0, %s136
      %s153 = sphi 0, %s137
      %s159 = sphi 0, %s161
      %s162 = sphi 0, %s159
      %s163 = sphi 0, %s162
      %s179 = sphi 0, %s163
      %s189 = sphi 0, %s191
      %s192 = sphi 0, %s189
      %s193 = sphi 0, %s192
      %s209 = sphi 0, %s193
    $region4: #{tpu_custom_call.1} parent=1 // loop_header_branch
      %19 = sbr.rel (%p17) target = $region8
    $region5: #{tpu_custom_call.1} parent=1 // loop_body
      %s21 = ssub.s32 %s16, 1
      %s22 = ssub.s32 %s16, 2
      %s32 = sadd.s32 1, %s25
      %p33 = scmp.ge.s32.totalorder %s32, 1
      %s34 = scalar_select %p33, 0, %s32
      %s35 = sadd.s32 1, %s24
      %s36 = scalar_select %p33, %s35, %s24
      %p37 = scmp.ge.s32.totalorder %s36, 2
      %s38 = scalar_select %p37, 0, %s36
      %s39 = sadd.s32 1, %s23
      %s40 = scalar_select %p37, %s39, %s23
      %p41 = scmp.ge.s32.totalorder %s40, 2
      %s42 = scalar_select %p41, 0, %s40
      %s43 = ssub.s32 %s23, %s42
      %s44 = ssub.s32 %s24, %s38
      %s45 = sor.u32 %s43, %s44
      %p46 = scmp.eq.s32.totalorder %s45, 0
      %s48 = sadd.s32 %s47, 1
      %s49 = scalar_select %p46, %s47, %s48
      %p52 = pneg %p46
      %p53 = scmp.eq.s32.totalorder %s16, 3
      %p54 = por %p52, %p53
      %p55 = scmp.ne.s32.totalorder %s47, %s50
      %p56 = scmp.eq.s32.totalorder %s16, 0
      %p57 = por %p55, %p56
      %p58 = scmp.ne.s32.totalorder %s47, %s50
      %p59 = scmp.eq.s32.totalorder %s21, 3
      %p60 = por %p58, %p59
      %p61 = scmp.ne.s32.totalorder %s50, %s51
      %p62 = scmp.eq.s32.totalorder %s21, 0
      %p63 = por %p61, %p62
      %p64 = scmp.ne.s32.totalorder %s50, %s51
      %p65 = scmp.eq.s32.totalorder %s22, 3
      %p66 = por %p64, %p65
      %p68 = scmp.ne.s32.totalorder %s51, %s67
      %p69 = scmp.eq.s32.totalorder %s22, 0
      %p70 = por %p68, %p69
      %s71 = ssub.s32 %s23, %s42
      %s72 = ssub.s32 %s24, %s38
      %s73 = sor.u32 %s71, %s72
      %s74 = ssub.s32 %s25, %s34
      %s75 = sor.u32 %s73, %s74
      %p76 = scmp.eq.s32.totalorder %s75, 0
      %s78 = sadd.s32 %s77, 1
      %s79 = scalar_select %p76, %s77, %s78
      %p82 = pneg %p76
      %p83 = scmp.eq.s32.totalorder %s16, 3
      %p84 = por %p82, %p83
      %p85 = scmp.ne.s32.totalorder %s77, %s80
      %p86 = scmp.eq.s32.totalorder %s16, 0
      %p87 = por %p85, %p86
      %p88 = scmp.ne.s32.totalorder %s77, %s80
      %p89 = scmp.eq.s32.totalorder %s21, 3
      %p90 = por %p88, %p89
      %p91 = scmp.ne.s32.totalorder %s80, %s81
      %p92 = scmp.eq.s32.totalorder %s21, 0
      %p93 = por %p91, %p92
      %p94 = scmp.ne.s32.totalorder %s80, %s81
      %p95 = scmp.eq.s32.totalorder %s22, 3
      %p96 = por %p94, %p95
      %p98 = scmp.ne.s32.totalorder %s81, %s97
      %p99 = scmp.eq.s32.totalorder %s22, 0
      %p100 = por %p98, %p99
      %s101 = ssub.s32 %s23, %s42
      %s102 = ssub.s32 %s24, %s38
      %s103 = sor.u32 %s101, %s102
      %s104 = ssub.s32 %s25, %s34
      %s105 = sor.u32 %s103, %s104
      %p106 = scmp.eq.s32.totalorder %s105, 0
      %s108 = sadd.s32 %s107, 1
      %s109 = scalar_select %p106, %s107, %s108
      %p112 = pneg %p106
      %p113 = scmp.eq.s32.totalorder %s16, 3
      %p114 = por %p112, %p113
      %p115 = scmp.ne.s32.totalorder %s107, %s110
      %p116 = scmp.eq.s32.totalorder %s16, 0
      %p117 = por %p115, %p116
      %p118 = scmp.ne.s32.totalorder %s107, %s110
      %p119 = scmp.eq.s32.totalorder %s21, 3
      %p120 = por %p118, %p119
      %p121 = scmp.ne.s32.totalorder %s110, %s111
      %p122 = scmp.eq.s32.totalorder %s21, 0
      %p123 = por %p121, %p122
      %p124 = scmp.ne.s32.totalorder %s110, %s111
      %p125 = scmp.eq.s32.totalorder %s22, 3
      %p126 = por %p124, %p125
      %p128 = scmp.ne.s32.totalorder %s111, %s127
      %p129 = scmp.eq.s32.totalorder %s22, 0
      %p130 = por %p128, %p129
      %s131 = ssub.s32 %s24, %s38
      %p132 = scmp.eq.s32.totalorder %s131, 0
      %s134 = sadd.s32 %s133, 1
      %s135 = scalar_select %p132, %s133, %s134
      %p138 = pneg %p132
      %p139 = scmp.eq.s32.totalorder %s16, 3
      %p140 = por %p138, %p139
      %p141 = scmp.ne.s32.totalorder %s133, %s136
      %p142 = scmp.eq.s32.totalorder %s16, 0
      %p143 = por %p141, %p142
      %p144 = scmp.ne.s32.totalorder %s133, %s136
      %p145 = scmp.eq.s32.totalorder %s21, 3
      %p146 = por %p144, %p145
      %p147 = scmp.ne.s32.totalorder %s136, %s137
      %p148 = scmp.eq.s32.totalorder %s21, 0
      %p149 = por %p147, %p148
      %p150 = scmp.ne.s32.totalorder %s136, %s137
      %p151 = scmp.eq.s32.totalorder %s22, 3
      %p152 = por %p150, %p151
      %p154 = scmp.ne.s32.totalorder %s137, %s153
      %p155 = scmp.eq.s32.totalorder %s22, 0
      %p156 = por %p154, %p155
      %s157 = ssub.s32 %s24, %s38
      %p158 = scmp.eq.s32.totalorder %s157, 0
      %s160 = sadd.s32 %s159, 1
      %s161 = scalar_select %p158, %s159, %s160
      %p164 = pneg %p158
      %p165 = scmp.eq.s32.totalorder %s16, 3
      %p166 = por %p164, %p165
      %p167 = scmp.ne.s32.totalorder %s159, %s162
      %p168 = scmp.eq.s32.totalorder %s16, 0
      %p169 = por %p167, %p168
      %p170 = scmp.ne.s32.totalorder %s159, %s162
      %p171 = scmp.eq.s32.totalorder %s21, 3
      %p172 = por %p170, %p171
      %p173 = scmp.ne.s32.totalorder %s162, %s163
      %p174 = scmp.eq.s32.totalorder %s21, 0
      %p175 = por %p173, %p174
      %p176 = scmp.ne.s32.totalorder %s162, %s163
      %p177 = scmp.eq.s32.totalorder %s22, 3
      %p178 = por %p176, %p177
      %p180 = scmp.ne.s32.totalorder %s163, %s179
      %p181 = scmp.eq.s32.totalorder %s22, 0
      %p182 = por %p180, %p181
      %s183 = ssub.s32 %s23, %s42
      %s184 = ssub.s32 %s24, %s38
      %s185 = sor.u32 %s183, %s184
      %s186 = ssub.s32 %s25, %s34
      %s187 = sor.u32 %s185, %s186
      %p188 = scmp.eq.s32.totalorder %s187, 0
      %s190 = sadd.s32 %s189, 1
      %s191 = scalar_select %p188, %s189, %s190
      %p194 = pneg %p188
      %p195 = scmp.eq.s32.totalorder %s16, 3
      %p196 = por %p194, %p195
      %p197 = scmp.ne.s32.totalorder %s189, %s192
      %p198 = scmp.eq.s32.totalorder %s16, 0
      %p199 = por %p197, %p198
      %p200 = scmp.ne.s32.totalorder %s189, %s192
      %p201 = scmp.eq.s32.totalorder %s21, 3
      %p202 = por %p200, %p201
      %p203 = scmp.ne.s32.totalorder %s192, %s193
      %p204 = scmp.eq.s32.totalorder %s21, 0
      %p205 = por %p203, %p204
      %p206 = scmp.ne.s32.totalorder %s192, %s193
      %p207 = scmp.eq.s32.totalorder %s22, 3
      %p208 = por %p206, %p207
      %p210 = scmp.ne.s32.totalorder %s193, %s209
      %p211 = scmp.eq.s32.totalorder %s22, 0
      %p212 = por %p210, %p211
      %p213 = scmp.le.s32.totalorder 1, %s16
      %p214 = scmp.lt.s32.totalorder %s16, 5
      %p215 = pnand %p213, %p214
      %p216 = pneg %p215
      // Predicated region
      $region9: #{tpu_custom_call.1} parent=5 // pred_check
        _
      $region10: #{tpu_custom_call.1} parent=5 // pred_check_branch
        %218 = sbr.rel (%p215) target = $region12
      $region11: #{tpu_custom_call.1} parent=5 // pred_region
        %s219 = ssub.s32 %s16, 1
      $region12: #{tpu_custom_call.1} parent=5 // pred_fallthru
        _
      %p220 = scmp.lt.s32.totalorder %s16, 4
      // Predicated region
      $region13: #{tpu_custom_call.1} parent=5 // pred_check
        %p221 = pneg %p220
      $region14: #{tpu_custom_call.1} parent=5 // pred_check_branch
        %223 = sbr.rel (%p221) target = $region16
      $region15: #{tpu_custom_call.1} parent=5 // pred_region
        // Predicated region
        $region17: #{tpu_custom_call.1} parent=15 // pred_check
          %p224 = pneg %p57
        $region18: #{tpu_custom_call.1} parent=15 // pred_check_branch
          %226 = sbr.rel (%p224) target = $region20
        $region19: #{tpu_custom_call.1} parent=15 // pred_region
          %p227 = scmp.lt.s32.totalorder %s23, 1
          %s228 = scalar_select %p227, %s23, 1
          %p229 = scmp.lt.s32.totalorder %s24, 1
          %s230 = scalar_select %p229, %s24, 1
          %s231 = smul.addr %s230, 2
          %s232 = smul.addr %s228, 4
          %s233 = sadd.s32 %s231, %s232
          %s234 = smul.addr %s233, 4
          %s235 = scalar_lea.vmem %s1, %s234
        $region20: #{tpu_custom_call.1} parent=15 // pred_fallthru
          _
        // Predicated region
        $region21: #{tpu_custom_call.1} parent=15 // pred_check
          %p236 = pneg %p87
        $region22: #{tpu_custom_call.1} parent=15 // pred_check_branch
          %238 = sbr.rel (%p236) target = $region24
        $region23: #{tpu_custom_call.1} parent=15 // pred_region
          %p239 = scmp.lt.s32.totalorder %s23, 1
          %s240 = scalar_select %p239, %s23, 1
          %p241 = scmp.lt.s32.totalorder %s24, 1
          %s242 = scalar_select %p241, %s24, 1
          %p243 = scmp.lt.s32.totalorder %s25, 0
          %s244 = scalar_select %p243, %s25, 0
          %s245 = sadd.s32 %s244, %s242
          %s246 = smul.addr %s240, 2
          %s247 = sadd.s32 %s245, %s246
          %s248 = smul.addr %s247, 4
          %s249 = scalar_lea.vmem %s2, %s248
        $region24: #{tpu_custom_call.1} parent=15 // pred_fallthru
          _
        // Predicated region
        $region25: #{tpu_custom_call.1} parent=15 // pred_check
          %p250 = pneg %p117
        $region26: #{tpu_custom_call.1} parent=15 // pred_check_branch
          %252 = sbr.rel (%p250) target = $region28
        $region27: #{tpu_custom_call.1} parent=15 // pred_region
          %p253 = scmp.lt.s32.totalorder %s23, 1
          %s254 = scalar_select %p253, %s23, 1
          %p255 = scmp.lt.s32.totalorder %s24, 1
          %s256 = scalar_select %p255, %s24, 1
          %p257 = scmp.lt.s32.totalorder %s25, 0
          %s258 = scalar_select %p257, %s25, 0
          %s259 = sadd.s32 %s258, %s256
          %s260 = smul.addr %s254, 2
          %s261 = sadd.s32 %s259, %s260
          %s262 = smul.addr %s261, 2
          %s263 = scalar_lea.vmem %s3, %s262
        $region28: #{tpu_custom_call.1} parent=15 // pred_fallthru
          _
        // Predicated region
        $region29: #{tpu_custom_call.1} parent=15 // pred_check
          %p264 = pneg %p143
        $region30: #{tpu_custom_call.1} parent=15 // pred_check_branch
          %266 = sbr.rel (%p264) target = $region32
        $region31: #{tpu_custom_call.1} parent=15 // pred_region
          %p267 = scmp.lt.s32.totalorder %s24, 1
          %s268 = scalar_select %p267, %s24, 1
          %s269 = smul.addr %s268, 4
          %s270 = scalar_lea.vmem %s4, %s269
        $region32: #{tpu_custom_call.1} parent=15 // pred_fallthru
          _
        // Predicated region
        $region33: #{tpu_custom_call.1} parent=15 // pred_check
          %p271 = pneg %p169
        $region34: #{tpu_custom_call.1} parent=15 // pred_check_branch
          %273 = sbr.rel (%p271) target = $region36
        $region35: #{tpu_custom_call.1} parent=15 // pred_region
          %p274 = scmp.lt.s32.totalorder %s24, 1
          %s275 = scalar_select %p274, %s24, 1
          %s276 = smul.addr %s275, 8
          %s277 = scalar_lea.vmem %s5, %s276
        $region36: #{tpu_custom_call.1} parent=15 // pred_fallthru
          _
      $region16: #{tpu_custom_call.1} parent=5 // pred_fallthru
        _
      %p278 = scmp.le.s32.totalorder 1, %s16
      %p279 = scmp.lt.s32.totalorder %s16, 5
      %p280 = pnand %p278, %p279
      %p281 = pneg %p280
      // Predicated region
      $region37: #{tpu_custom_call.1} parent=5 // pred_check
        _
      $region38: #{tpu_custom_call.1} parent=5 // pred_check_branch
        %283 = sbr.rel (%p280) target = $region40
      $region39: #{tpu_custom_call.1} parent=5 // pred_region
        %s284 = ssub.s32 %s16, 1
        %p285 = scmp.lt.s32.totalorder %s26, 1
        %s286 = scalar_select %p285, %s26, 1
        %p287 = scmp.lt.s32.totalorder %s27, 1
        %s288 = scalar_select %p287, %s27, 1
        %s289 = smul.addr %s288, 2
        %s290 = smul.addr %s286, 4
        %s291 = sadd.s32 %s289, %s290
        %s292 = smul.addr %s291, 4
        %s293 = scalar_lea.vmem %s1, %s292
        %p294 = pneg %p63
        %p295 = pneg %p60
        %p296 = scmp.lt.s32.totalorder %s26, 1
        %s297 = scalar_select %p296, %s26, 1
        %p298 = scmp.lt.s32.totalorder %s27, 1
        %s299 = scalar_select %p298, %s27, 1
        %p300 = scmp.lt.s32.totalorder %s28, 0
        %s301 = scalar_select %p300, %s28, 0
        %s302 = sadd.s32 %s301, %s299
        %s303 = smul.addr %s297, 2
        %s304 = sadd.s32 %s302, %s303
        %s305 = smul.addr %s304, 4
        %s306 = scalar_lea.vmem %s2, %s305
        %p307 = pneg %p93
        %p308 = pneg %p90
        %p309 = scmp.lt.s32.totalorder %s26, 1
        %s310 = scalar_select %p309, %s26, 1
        %p311 = scmp.lt.s32.totalorder %s27, 1
        %s312 = scalar_select %p311, %s27, 1
        %p313 = scmp.lt.s32.totalorder %s28, 0
        %s314 = scalar_select %p313, %s28, 0
        %s315 = sadd.s32 %s314, %s312
        %s316 = smul.addr %s310, 2
        %s317 = sadd.s32 %s315, %s316
        %s318 = smul.addr %s317, 2
        %s319 = scalar_lea.vmem %s3, %s318
        %p320 = pneg %p123
        %p321 = pneg %p120
        %p322 = scmp.lt.s32.totalorder %s27, 1
        %s323 = scalar_select %p322, %s27, 1
        %s324 = smul.addr %s323, 4
        %s325 = scalar_lea.vmem %s4, %s324
        %p326 = pneg %p149
        %p327 = pneg %p146
        %p328 = scmp.lt.s32.totalorder %s27, 1
        %s329 = scalar_select %p328, %s27, 1
        %s330 = smul.addr %s329, 8
        %s331 = scalar_lea.vmem %s5, %s330
        %p332 = pneg %p175
        %p333 = pneg %p172
        %p334 = pneg %p205
        %p335 = pneg %p202
        %s336 = sand.u32 %s192, 1
        %s337 = scalar_lea.sflag [#allocation6], %s336
        %s338 = sand.u32 %s192, 1
        %s339 = smul.addr %s338, 8
        %s340 = scalar_lea.vmem [#allocation5], %s339
        %p341 = scmp.lt.s32.totalorder %s26, 1
        %s342 = scalar_select %p341, %s26, 1
        %p343 = scmp.lt.s32.totalorder %s27, 1
        %s344 = scalar_select %p343, %s27, 1
        %s345 = smul.addr %s344, 2
        %s346 = smul.addr %s342, 4
        %s347 = sadd.s32 %s345, %s346
        %s348 = smul.addr %s347, 4
        %s349 = scalar_lea.vmem %s1, %s348
        %p350 = scmp.lt.s32.totalorder %s26, 1
        %s351 = scalar_select %p350, %s26, 1
        %p352 = scmp.lt.s32.totalorder %s27, 1
        %s353 = scalar_select %p352, %s27, 1
        %p354 = scmp.lt.s32.totalorder %s28, 0
        %s355 = scalar_select %p354, %s28, 0
        %s356 = sadd.s32 %s355, %s353
        %s357 = smul.addr %s351, 2
        %s358 = sadd.s32 %s356, %s357
        %s359 = smul.addr %s358, 4
        %s360 = scalar_lea.vmem %s2, %s359
        %p361 = scmp.lt.s32.totalorder %s26, 1
        %s362 = scalar_select %p361, %s26, 1
        %p363 = scmp.lt.s32.totalorder %s27, 1
        %s364 = scalar_select %p363, %s27, 1
        %p365 = scmp.lt.s32.totalorder %s28, 0
        %s366 = scalar_select %p365, %s28, 0
        %s367 = sadd.s32 %s366, %s364
        %s368 = smul.addr %s362, 2
        %s369 = sadd.s32 %s367, %s368
        %s370 = smul.addr %s369, 2
        %s371 = scalar_lea.vmem %s3, %s370
        %p372 = scmp.lt.s32.totalorder %s27, 1
        %s373 = scalar_select %p372, %s27, 1
        %s374 = smul.addr %s373, 4
        %s375 = scalar_lea.vmem %s4, %s374
        %p376 = scmp.lt.s32.totalorder %s27, 1
        %s377 = scalar_select %p376, %s27, 1
        %s378 = smul.addr %s377, 8
        %s379 = scalar_lea.vmem %s5, %s378
        %v382 = vlaneseq
        %v383 = vand.u32 %v382, 127
        %s384 = smul.u32 %s28, 128
        %v385 = vstv %s384
        %v386 = vadd.s32 %v383, %v385
        %v387 = vsub.s32 %v386, 1
        %v388 = vcvt.s32.f32 %v387
        %v389 = vlaneseq
        %v390 = vshrl.u32 %v389, 7
        %v391 = vadd.s32 %v390, 8
        %v392 = vadd.s32 %v390, 16
        %v393 = vadd.s32 %v390, 24
        %v394 = vadd.s32 %v390, 32
        %v395 = vadd.s32 %v390, 40
        %v396 = vadd.s32 %v390, 48
        %v397 = vadd.s32 %v390, 56
        %v398 = vadd.s32 %v390, 64
        %v399 = vadd.s32 %v390, 72
        %v400 = vadd.s32 %v390, 80
        %v401 = vadd.s32 %v390, 88
        %v402 = vadd.s32 %v390, 96
        %v403 = vadd.s32 %v390, 104
        %v404 = vadd.s32 %v390, 112
        %v405 = vadd.s32 %v390, 120
        %v406 = vcvt.s32.f32 %v390
        %v407 = vcvt.s32.f32 %v391
        %v408 = vcvt.s32.f32 %v392
        %v409 = vcvt.s32.f32 %v393
        %v410 = vcvt.s32.f32 %v394
        %v411 = vcvt.s32.f32 %v395
        %v412 = vcvt.s32.f32 %v396
        %v413 = vcvt.s32.f32 %v397
        %v414 = vcvt.s32.f32 %v398
        %v415 = vcvt.s32.f32 %v399
        %v416 = vcvt.s32.f32 %v400
        %v417 = vcvt.s32.f32 %v401
        %v418 = vcvt.s32.f32 %v402
        %v419 = vcvt.s32.f32 %v403
        %v420 = vcvt.s32.f32 %v404
        %v421 = vcvt.s32.f32 %v405
        %v422 = vld [vmem:[%s349] sm:$0xf]
        %v423 = vld [vmem:[%s349 + $0x4] sm:$0xf]
        %v424 = vld [vmem:[%s360] sm:$0x1]
        %v425 = vld [vmem:[%s371] sm:$0x1]
        %v426 = vadd.f32 %v388, 0.0
        %v427 = vadd.f32 %v426, %v424
        %v428 = vlaneseq
        %v429 = vshrl.u32 %v428, 7
        %v430 = vsub.s32 0, %v429
        %v431 = vrot.slane %v427, %v430
        %v432 = vsub.f32 %v406, %v431
        %v433 = vsub.f32 %v407, %v431
        %v434 = vsub.f32 %v408, %v431
        %v435 = vsub.f32 %v409, %v431
        %v436 = vsub.f32 %v410, %v431
        %v437 = vsub.f32 %v411, %v431
        %v438 = vsub.f32 %v412, %v431
        %v439 = vsub.f32 %v413, %v431
        %v440 = vsub.f32 %v414, %v431
        %v441 = vsub.f32 %v415, %v431
        %v442 = vsub.f32 %v416, %v431
        %v443 = vsub.f32 %v417, %v431
        %v444 = vsub.f32 %v418, %v431
        %v445 = vsub.f32 %v419, %v431
        %v446 = vsub.f32 %v420, %v431
        %v447 = vsub.f32 %v421, %v431
        %v448 = vpack.c.bf16 %v433, %v432
        %v449 = vpack.c.bf16 %v435, %v434
        %v450 = vpack.c.bf16 %v437, %v436
        %v451 = vpack.c.bf16 %v439, %v438
        %v452 = vpack.c.bf16 %v441, %v440
        %v453 = vpack.c.bf16 %v443, %v442
        %v454 = vpack.c.bf16 %v445, %v444
        %v455 = vpack.c.bf16 %v447, %v446
        %v456 = vand.u32 2147450879, %v448
        %v457 = vand.u32 2147450879, %v449
        %v458 = vand.u32 2147450879, %v450
        %v459 = vand.u32 2147450879, %v451
        %v460 = vand.u32 2147450879, %v452
        %v461 = vand.u32 2147450879, %v453
        %v462 = vand.u32 2147450879, %v454
        %v463 = vand.u32 2147450879, %v455
        %v464 = vsub.bf16 1065369472, %v456
        %v465 = vsub.bf16 1065369472, %v457
        %v466 = vsub.bf16 1065369472, %v458
        %v467 = vsub.bf16 1065369472, %v459
        %v468 = vsub.bf16 1065369472, %v460
        %v469 = vsub.bf16 1065369472, %v461
        %v470 = vsub.bf16 1065369472, %v462
        %v471 = vsub.bf16 1065369472, %v463
        %v472 = vmax.bf16 %v464, 0
        %v473 = vmax.bf16 %v465, 0
        %v474 = vmax.bf16 %v466, 0
        %v475 = vmax.bf16 %v467, 0
        %v476 = vmax.bf16 %v468, 0
        %v477 = vmax.bf16 %v469, 0
        %v478 = vmax.bf16 %v470, 0
        %v479 = vmax.bf16 %v471, 0
        %v482 = vunpack.c.l.b16 %v422
        %v483 = vunpack.c.l.b16 %v423
        %v484 = vpack.c.b16 %v483, %v482
        %486 = vmatprep.subr.bf16.mxu0 0
        %487 = vmatpush1.bf16.msra.mxu0 %v472
        %488 = vmatprep.subr.bf16.mxu0 0
        %489 = vmatpush1.bf16.msra.mxu0 %v473
        %490 = vmatprep.subr.bf16.mxu0 0
        %491 = vmatpush1.bf16.msra.mxu0 %v474
        %492 = vmatprep.subr.bf16.mxu0 0
        %493 = vmatpush1.bf16.msra.mxu0 %v475
        %494 = vmatprep.subr.bf16.mxu0 0
        %495 = vmatpush1.bf16.msra.mxu0 %v476
        %496 = vmatprep.subr.bf16.mxu0 0
        %497 = vmatpush1.bf16.msra.mxu0 %v477
        %498 = vmatprep.subr.bf16.mxu0 0
        %499 = vmatpush1.bf16.msra.mxu0 %v478
        %500 = vmatprep.subr.bf16.mxu0 0
        %501 = vmatpush1.bf16.msra.mxu0 %v479
        %502 = vmatprep.subr.bf16.mxu0 0
        %503 = vmatpush1.bf16.msra.mxu0 0
        %504 = vmatprep.subr.bf16.mxu0 0
        %505 = vmatpush1.bf16.msra.mxu0 0
        %506 = vmatprep.subr.bf16.mxu0 0
        %507 = vmatpush1.bf16.msra.mxu0 0
        %508 = vmatprep.subr.bf16.mxu0 0
        %509 = vmatpush1.bf16.msra.mxu0 0
        %510 = vmatprep.subr.bf16.mxu0 0
        %511 = vmatpush1.bf16.msra.mxu0 0
        %512 = vmatprep.subr.bf16.mxu0 0
        %513 = vmatpush1.bf16.msra.mxu0 0
        %514 = vmatprep.subr.bf16.mxu0 0
        %515 = vmatpush1.bf16.msra.mxu0 0
        %516 = vmatprep.subr.bf16.mxu0 0
        %517 = vmatpush1.bf16.msra.mxu0 0
        %518 = vmatprep.mubr.bf16.mxu0 0
        %519 = vmatmul.mubr.bf16.gmra.mrb[0].mxu0 %v484
        %v520 = vpop.f32.mrb[0].mxu0
        %v521 = vadd.f32 0.0, %v520
        %v522 = vpop.f32.mrb[0].mxu0
        %v523 = vpop.f32.mrb[0].mxu0
        %v524 = vadd.f32 0.0, %v523
        %v525 = vpop.f32.mrb[0].mxu0
        %526 = vdwg.mxu0
        %v527 = vunpack.c.l.bf16 %v425
        %v528 = vlaneseq
        %v529 = vshrl.u32 %v528, 7
        %v530 = vsub.s32 0, %v529
        %v531 = vrot.slane %v527, %v530
        %v532 = vmul.f32 %v521, %v531
        %v533 = vmul.f32 %v524, %v531
        %v534 = vpack.c.bf16 %v533, %v532
        %535 = vst [vmem:[#allocation2] sm:$0xff] %v534
        %v536 = vld [vmem:[%s349] sm:$0xf]
        %v537 = vld [vmem:[%s349 + $0x4] sm:$0xf]
        %v538 = vld [vmem:[%s360 + $0x1] sm:$0x1]
        %v539 = vld [vmem:[%s371] sm:$0x1]
        %v540 = vadd.f32 %v388, 1.0
        %v541 = vadd.f32 %v540, %v538
        %v542 = vlaneseq
        %v543 = vshrl.u32 %v542, 7
        %v544 = vsub.s32 0, %v543
        %v545 = vrot.slane %v541, %v544
        %v546 = vsub.f32 %v406, %v545
        %v547 = vsub.f32 %v407, %v545
        %v548 = vsub.f32 %v408, %v545
        %v549 = vsub.f32 %v409, %v545
        %v550 = vsub.f32 %v410, %v545
        %v551 = vsub.f32 %v411, %v545
        %v552 = vsub.f32 %v412, %v545
        %v553 = vsub.f32 %v413, %v545
        %v554 = vsub.f32 %v414, %v545
        %v555 = vsub.f32 %v415, %v545
        %v556 = vsub.f32 %v416, %v545
        %v557 = vsub.f32 %v417, %v545
        %v558 = vsub.f32 %v418, %v545
        %v559 = vsub.f32 %v419, %v545
        %v560 = vsub.f32 %v420, %v545
        %v561 = vsub.f32 %v421, %v545
        %v562 = vpack.c.bf16 %v547, %v546
        %v563 = vpack.c.bf16 %v549, %v548
        %v564 = vpack.c.bf16 %v551, %v550
        %v565 = vpack.c.bf16 %v553, %v552
        %v566 = vpack.c.bf16 %v555, %v554
        %v567 = vpack.c.bf16 %v557, %v556
        %v568 = vpack.c.bf16 %v559, %v558
        %v569 = vpack.c.bf16 %v561, %v560
        %v570 = vand.u32 2147450879, %v562
        %v571 = vand.u32 2147450879, %v563
        %v572 = vand.u32 2147450879, %v564
        %v573 = vand.u32 2147450879, %v565
        %v574 = vand.u32 2147450879, %v566
        %v575 = vand.u32 2147450879, %v567
        %v576 = vand.u32 2147450879, %v568
        %v577 = vand.u32 2147450879, %v569
        %v578 = vsub.bf16 1065369472, %v570
        %v579 = vsub.bf16 1065369472, %v571
        %v580 = vsub.bf16 1065369472, %v572
        %v581 = vsub.bf16 1065369472, %v573
        %v582 = vsub.bf16 1065369472, %v574
        %v583 = vsub.bf16 1065369472, %v575
        %v584 = vsub.bf16 1065369472, %v576
        %v585 = vsub.bf16 1065369472, %v577
        %v586 = vmax.bf16 %v578, 0
        %v587 = vmax.bf16 %v579, 0
        %v588 = vmax.bf16 %v580, 0
        %v589 = vmax.bf16 %v581, 0
        %v590 = vmax.bf16 %v582, 0
        %v591 = vmax.bf16 %v583, 0
        %v592 = vmax.bf16 %v584, 0
        %v593 = vmax.bf16 %v585, 0
        %v596 = vunpack.c.l.b16 %v536
        %v597 = vunpack.c.l.b16 %v537
        %v598 = vpack.c.b16 %v597, %v596
        %600 = vmatprep.subr.bf16.mxu0 0
        %601 = vmatpush1.bf16.msra.mxu0 %v586
        %602 = vmatprep.subr.bf16.mxu0 0
        %603 = vmatpush1.bf16.msra.mxu0 %v587
        %604 = vmatprep.subr.bf16.mxu0 0
        %605 = vmatpush1.bf16.msra.mxu0 %v588
        %606 = vmatprep.subr.bf16.mxu0 0
        %607 = vmatpush1.bf16.msra.mxu0 %v589
        %608 = vmatprep.subr.bf16.mxu0 0
        %609 = vmatpush1.bf16.msra.mxu0 %v590
        %610 = vmatprep.subr.bf16.mxu0 0
        %611 = vmatpush1.bf16.msra.mxu0 %v591
        %612 = vmatprep.subr.bf16.mxu0 0
        %613 = vmatpush1.bf16.msra.mxu0 %v592
        %614 = vmatprep.subr.bf16.mxu0 0
        %615 = vmatpush1.bf16.msra.mxu0 %v593
        %616 = vmatprep.subr.bf16.mxu0 0
        %617 = vmatpush1.bf16.msra.mxu0 0
        %618 = vmatprep.subr.bf16.mxu0 0
        %619 = vmatpush1.bf16.msra.mxu0 0
        %620 = vmatprep.subr.bf16.mxu0 0
        %621 = vmatpush1.bf16.msra.mxu0 0
        %622 = vmatprep.subr.bf16.mxu0 0
        %623 = vmatpush1.bf16.msra.mxu0 0
        %624 = vmatprep.subr.bf16.mxu0 0
        %625 = vmatpush1.bf16.msra.mxu0 0
        %626 = vmatprep.subr.bf16.mxu0 0
        %627 = vmatpush1.bf16.msra.mxu0 0
        %628 = vmatprep.subr.bf16.mxu0 0
        %629 = vmatpush1.bf16.msra.mxu0 0
        %630 = vmatprep.subr.bf16.mxu0 0
        %631 = vmatpush1.bf16.msra.mxu0 0
        %632 = vmatprep.mubr.bf16.mxu0 0
        %633 = vmatmul.mubr.bf16.gmra.mrb[0].mxu0 %v598
        %v634 = vpop.f32.mrb[0].mxu0
        %v635 = vadd.f32 0.0, %v634
        %v636 = vpop.f32.mrb[0].mxu0
        %v637 = vpop.f32.mrb[0].mxu0
        %v638 = vadd.f32 0.0, %v637
        %v639 = vpop.f32.mrb[0].mxu0
        %640 = vdwg.mxu0
        %v641 = vunpack.c.l.bf16 %v539
        %v642 = vlaneseq
        %v643 = vshrl.u32 %v642, 7
        %v644 = vsub.s32 1, %v643
        %v645 = vrot.slane %v641, %v644
        %v646 = vmul.f32 %v635, %v645
        %v647 = vmul.f32 %v638, %v645
        %v648 = vpack.c.bf16 %v647, %v646
        %649 = vst [vmem:[#allocation2 + $0x8] sm:$0xff] %v648
        %v650 = vld [vmem:[%s349] sm:$0xf]
        %v651 = vld [vmem:[%s349 + $0x4] sm:$0xf]
        %v652 = vld [vmem:[%s360 + $0x2] sm:$0x1]
        %v653 = vld [vmem:[%s371] sm:$0x2]
        %v654 = vadd.f32 %v388, 2.0
        %v655 = vadd.f32 %v654, %v652
        %v656 = vlaneseq
        %v657 = vshrl.u32 %v656, 7
        %v658 = vsub.s32 0, %v657
        %v659 = vrot.slane %v655, %v658
        %v660 = vsub.f32 %v406, %v659
        %v661 = vsub.f32 %v407, %v659
        %v662 = vsub.f32 %v408, %v659
        %v663 = vsub.f32 %v409, %v659
        %v664 = vsub.f32 %v410, %v659
        %v665 = vsub.f32 %v411, %v659
        %v666 = vsub.f32 %v412, %v659
        %v667 = vsub.f32 %v413, %v659
        %v668 = vsub.f32 %v414, %v659
        %v669 = vsub.f32 %v415, %v659
        %v670 = vsub.f32 %v416, %v659
        %v671 = vsub.f32 %v417, %v659
        %v672 = vsub.f32 %v418, %v659
        %v673 = vsub.f32 %v419, %v659
        %v674 = vsub.f32 %v420, %v659
        %v675 = vsub.f32 %v421, %v659
        %v676 = vpack.c.bf16 %v661, %v660
        %v677 = vpack.c.bf16 %v663, %v662
        %v678 = vpack.c.bf16 %v665, %v664
        %v679 = vpack.c.bf16 %v667, %v666
        %v680 = vpack.c.bf16 %v669, %v668
        %v681 = vpack.c.bf16 %v671, %v670
        %v682 = vpack.c.bf16 %v673, %v672
        %v683 = vpack.c.bf16 %v675, %v674
        %v684 = vand.u32 2147450879, %v676
        %v685 = vand.u32 2147450879, %v677
        %v686 = vand.u32 2147450879, %v678
        %v687 = vand.u32 2147450879, %v679
        %v688 = vand.u32 2147450879, %v680
        %v689 = vand.u32 2147450879, %v681
        %v690 = vand.u32 2147450879, %v682
        %v691 = vand.u32 2147450879, %v683
        %v692 = vsub.bf16 1065369472, %v684
        %v693 = vsub.bf16 1065369472, %v685
        %v694 = vsub.bf16 1065369472, %v686
        %v695 = vsub.bf16 1065369472, %v687
        %v696 = vsub.bf16 1065369472, %v688
        %v697 = vsub.bf16 1065369472, %v689
        %v698 = vsub.bf16 1065369472, %v690
        %v699 = vsub.bf16 1065369472, %v691
        %v700 = vmax.bf16 %v692, 0
        %v701 = vmax.bf16 %v693, 0
        %v702 = vmax.bf16 %v694, 0
        %v703 = vmax.bf16 %v695, 0
        %v704 = vmax.bf16 %v696, 0
        %v705 = vmax.bf16 %v697, 0
        %v706 = vmax.bf16 %v698, 0
        %v707 = vmax.bf16 %v699, 0
        %v710 = vunpack.c.l.b16 %v650
        %v711 = vunpack.c.l.b16 %v651
        %v712 = vpack.c.b16 %v711, %v710
        %714 = vmatprep.subr.bf16.mxu0 0
        %715 = vmatpush1.bf16.msra.mxu0 %v700
        %716 = vmatprep.subr.bf16.mxu0 0
        %717 = vmatpush1.bf16.msra.mxu0 %v701
        %718 = vmatprep.subr.bf16.mxu0 0
        %719 = vmatpush1.bf16.msra.mxu0 %v702
        %720 = vmatprep.subr.bf16.mxu0 0
        %721 = vmatpush1.bf16.msra.mxu0 %v703
        %722 = vmatprep.subr.bf16.mxu0 0
        %723 = vmatpush1.bf16.msra.mxu0 %v704
        %724 = vmatprep.subr.bf16.mxu0 0
        %725 = vmatpush1.bf16.msra.mxu0 %v705
        %726 = vmatprep.subr.bf16.mxu0 0
        %727 = vmatpush1.bf16.msra.mxu0 %v706
        %728 = vmatprep.subr.bf16.mxu0 0
        %729 = vmatpush1.bf16.msra.mxu0 %v707
        %730 = vmatprep.subr.bf16.mxu0 0
        %731 = vmatpush1.bf16.msra.mxu0 0
        %732 = vmatprep.subr.bf16.mxu0 0
        %733 = vmatpush1.bf16.msra.mxu0 0
        %734 = vmatprep.subr.bf16.mxu0 0
        %735 = vmatpush1.bf16.msra.mxu0 0
        %736 = vmatprep.subr.bf16.mxu0 0
        %737 = vmatpush1.bf16.msra.mxu0 0
        %738 = vmatprep.subr.bf16.mxu0 0
        %739 = vmatpush1.bf16.msra.mxu0 0
        %740 = vmatprep.subr.bf16.mxu0 0
        %741 = vmatpush1.bf16.msra.mxu0 0
        %742 = vmatprep.subr.bf16.mxu0 0
        %743 = vmatpush1.bf16.msra.mxu0 0
        %744 = vmatprep.subr.bf16.mxu0 0
        %745 = vmatpush1.bf16.msra.mxu0 0
        %746 = vmatprep.mubr.bf16.mxu0 0
        %747 = vmatmul.mubr.bf16.gmra.mrb[0].mxu0 %v712
        %v748 = vpop.f32.mrb[0].mxu0
        %v749 = vadd.f32 0.0, %v748
        %v750 = vpop.f32.mrb[0].mxu0
        %v751 = vpop.f32.mrb[0].mxu0
        %v752 = vadd.f32 0.0, %v751
        %v753 = vpop.f32.mrb[0].mxu0
        %754 = vdwg.mxu0
        %v755 = vunpack.c.l.bf16 %v653
        %v756 = vlaneseq
        %v757 = vshrl.u32 %v756, 7
        %v758 = vsub.s32 2, %v757
        %v759 = vrot.slane %v755, %v758
        %v760 = vmul.f32 %v749, %v759
        %v761 = vmul.f32 %v752, %v759
        %v762 = vpack.c.bf16 %v761, %v760
        %763 = vst [vmem:[#allocation2 + $0x10] sm:$0xff] %v762
        %v764 = vld [vmem:[%s375] sm:$0xf]
        %v765 = vld [vmem:[#allocation2] sm:$0xff]
        %v766 = vld [vmem:[#allocation2 + $0x8] sm:$0xff]
        %v767 = vld [vmem:[#allocation2 + $0x10] sm:$0xff]
        %v768 = vld [vmem:[%s379] sm:$0xff]
        %770 = vset.pattern.permute.xlu0 0
        %771 = vperm.xlu0 %770, %v768
        %v772 = vpop.permute.xlu0 %771
        %vm774 = vcmask 392192
        %v776 = vsel %vm774, %v764, 0
        %778 = vmatprep.subr.bf16.mxu0 0
        %779 = vmatpush1.bf16.msra.mxu0 %v765
        %780 = vmatprep.subr.bf16.mxu0 0
        %781 = vmatpush1.bf16.msra.mxu0 %v766
        %782 = vmatprep.subr.bf16.mxu0 0
        %783 = vmatpush1.bf16.msra.mxu0 %v767
        %784 = vmatprep.subr.bf16.mxu0 0
        %785 = vmatpush1.bf16.msra.mxu0 0
        %786 = vmatprep.subr.bf16.mxu0 0
        %787 = vmatpush1.bf16.msra.mxu0 0
        %788 = vmatprep.subr.bf16.mxu0 0
        %789 = vmatpush1.bf16.msra.mxu0 0
        %790 = vmatprep.subr.bf16.mxu0 0
        %791 = vmatpush1.bf16.msra.mxu0 0
        %792 = vmatprep.subr.bf16.mxu0 0
        %793 = vmatpush1.bf16.msra.mxu0 0
        %794 = vmatprep.subr.bf16.mxu0 0
        %795 = vmatpush1.bf16.msra.mxu0 0
        %796 = vmatprep.subr.bf16.mxu0 0
        %797 = vmatpush1.bf16.msra.mxu0 0
        %798 = vmatprep.subr.bf16.mxu0 0
        %799 = vmatpush1.bf16.msra.mxu0 0
        %800 = vmatprep.subr.bf16.mxu0 0
        %801 = vmatpush1.bf16.msra.mxu0 0
        %802 = vmatprep.subr.bf16.mxu0 0
        %803 = vmatpush1.bf16.msra.mxu0 0
        %804 = vmatprep.subr.bf16.mxu0 0
        %805 = vmatpush1.bf16.msra.mxu0 0
        %806 = vmatprep.subr.bf16.mxu0 0
        %807 = vmatpush1.bf16.msra.mxu0 0
        %808 = vmatprep.subr.bf16.mxu0 0
        %809 = vmatpush1.bf16.msra.mxu0 0
        %810 = vmatprep.mubr.bf16.mxu0 0
        %811 = vmatmul.mubr.bf16.gmra.mrb[0].mxu0 %v776
        %v812 = vpop.f32.mrb[0].mxu0
        %v813 = vadd.f32 %v772, %v812
        %v814 = vpop.f32.mrb[0].mxu0
        %v815 = vpop.f32.mrb[0].mxu0
        %v816 = vpop.f32.mrb[0].mxu0
        %817 = vdwg.mxu0
        %818 = vst [vmem:[%s340] sm:$0xff] %v813
        %s819 = sand.u32 %s192, 1
        %s820 = scalar_lea.sflag [#allocation6], %s819
        %s821 = sand.u32 %s192, 1
        %s822 = smul.addr %s821, 8
        %s823 = scalar_lea.vmem [#allocation5], %s822
        // Predicated region
        $region41: #{tpu_custom_call.1} parent=39 // pred_check
          %p824 = pneg %p202
        $region42: #{tpu_custom_call.1} parent=39 // pred_check_branch
          %826 = sbr.rel (%p824) target = $region44
        $region43: #{tpu_custom_call.1} parent=39 // pred_region
          %s828 = ssub.s32 128, 128
          %829 = vsyncadd %s820, %s828
          %s830 = sadd.s32 %s28, %s27
          %s831 = smul.addr %s26, 2
          %s832 = sadd.s32 %s830, %s831
          %s833 = smul.addr %s832, 128
          %s834 = scalar_lea.hbm %s6, %s833
          %s836 = sshll.u32 %s823, 4
          %s837 = int_to_ptr.vmem [resolvable:$true] %s836
          %839 = dma.vmem_to_hbm [thread:$0]  %s837, 128, %s834, %s820
        $region44: #{tpu_custom_call.1} parent=39 // pred_fallthru
          _
      $region40: #{tpu_custom_call.1} parent=5 // pred_fallthru
        _
      %p840 = scmp.le.s32.totalorder 2, %s16
      // Predicated region
      $region45: #{tpu_custom_call.1} parent=5 // pred_check
        %p841 = pneg %p840
      $region46: #{tpu_custom_call.1} parent=5 // pred_check_branch
        %843 = sbr.rel (%p841) target = $region48
      $region47: #{tpu_custom_call.1} parent=5 // pred_region
        %s844 = ssub.s32 %s16, 2
        // Predicated region
        $region49: #{tpu_custom_call.1} parent=47 // pred_check
          %p845 = pneg %p208
        $region50: #{tpu_custom_call.1} parent=47 // pred_check_branch
          %847 = sbr.rel (%p845) target = $region52
        $region51: #{tpu_custom_call.1} parent=47 // pred_region
          %s848 = sand.u32 %s193, 1
          %s849 = scalar_lea.sflag [#allocation6], %s848
          %s850 = sand.u32 %s193, 1
          %s851 = smul.addr %s850, 8
          %s852 = scalar_lea.vmem [#allocation5], %s851
          %853 = dma.done %s849, 128
        $region52: #{tpu_custom_call.1} parent=47 // pred_fallthru
          _
      $region48: #{tpu_custom_call.1} parent=5 // pred_fallthru
        _
    $region6: #{tpu_custom_call.1} parent=1 // loop_footer
      %s20 = sadd.s32 1, %s16
    $region7: #{tpu_custom_call.1} parent=1 // loop_footer_branch
      %15 = sbr.rel target = $region3
    $region8: #{tpu_custom_call.1} parent=1 // loop_exit
      _
    %854 = vsyncpa [#allocation6], 1
    %s855 = scalar_lea.sflag [#allocation6], 1
    %856 = vsyncpa %s855, 1

</llo_original>
